<compile_context>
chip_gen: v7x
topology: tpu7x:2x2x1
jax: 0.10.0
libtpu: 0.0.40
codegen_flags: <defaults>
</compile_context>

<pallas_src>
import functools

import jax
import jax.numpy as jnp
from jax import lax
from jax.experimental import pallas as pl
from jax.experimental.pallas import tpu as pltpu

VOCAB = 9                 # nn.Embedding(9, embedding_dim)
FOLLOWER_ROT_LEN = 6      # synthetic len(state_rep.get_follower_rotation())
NUM_CHANNELS = 2          # prefix tensor has 2 entries -> 2 property channels
V_PAD = 128               # pairwise table (81 rows) zero-padded to a full lane width


def _round_up(x, m):
    return pl.cdiv(x, m) * m


def traj_break_kernel(idx_ref, w_ref, o_ref, *, chunk, n_chunks):
    # idx_ref: (1, TILE_N)  int32    combined pairwise index, lane-dense
    # w_ref  : (D, V_PAD)   bfloat16 transposed pairwise table, resident across grid
    # o_ref  : (D, TILE_N)  bfloat16 transposed output tile (lane-dense stores)
    v_pad = w_ref.shape[1]

    def body(c, carry):
        start = pl.multiple_of(c * chunk, 128)
        idx = idx_ref[:, pl.ds(start, chunk)]                       # (1, chunk)
        # one-hot over the padded vocab: int32 sublane iota vs sublane-broadcast
        # index row (cast to bf16 only at the MXU input -- v5e-friendly).
        iota_v = lax.broadcasted_iota(jnp.int32, (v_pad, chunk), 0)
        onehot = (iota_v == idx).astype(jnp.bfloat16)               # (V_PAD, chunk)
        # (D, V_PAD) @ (V_PAD, chunk) -> (D, chunk), f32 accumulation on the MXU
        blk = jnp.dot(w_ref[...], onehot, preferred_element_type=jnp.float32)
        # bf16 store is lossless: each column is exactly one bf16 table row.
        o_ref[:, pl.ds(start, chunk)] = blk.astype(o_ref.dtype)
        return carry

    lax.fori_loop(0, n_chunks, body, 0)


def precompute_pairwise_table(weight):
    """Module-init-time prep: W2[i*9+j] = W[i] + W[j], transposed/padded to (D,128) bf16."""
    v, d = weight.shape
    assert v == VOCAB
    w2 = (weight[:, None, :] + weight[None, :, :]).reshape(v * v, d)    # (81, D) f32
    w2t = jnp.zeros((d, V_PAD), jnp.float32).at[:, : v * v].set(w2.T)   # (D, 128)
    # ~2^-9 relative rounding vs the PyTorch f32 gather+sum; keep f32 here (and an
    # f32 kernel output) if exact parity is required -- it hides under the DMA.
    return w2t.astype(jnp.bfloat16)


def traj_break_forward(state_cn, prefix, w2t, *, tile_n=16384, chunk=512,
                       transposed_output=False):
    """state_cn: (2, N) int; prefix: (2,) int; w2t: (D, 128) bf16 pairwise table.

    Returns (N, D) float32 (module contract), or (D, N) bf16 if transposed_output.
    """
    c, n = state_cn.shape
    d, v_pad = w2t.shape
    assert c == NUM_CHANNELS and v_pad == V_PAD

    # ---- index prep (tiny fused XLA elementwise) ----
    idx = state_cn.astype(jnp.int32) + prefix.reshape(c, 1).astype(jnp.int32)  # (2, N)
    cidx = idx[0] * VOCAB + idx[1]                                             # (N,) in [0, 81)
    # NOTE: out-of-range state values silently select zero-padded table rows
    # instead of raising like nn.Embedding.

    # ---- N tiling ----
    # Per-step output is tile*D*2 bytes (bf16); cap tile at tile_n (~1 MiB at D=32)
    # to amortize the ~0.35us per-grid-step overhead, and force >=2 grid steps
    # whenever there are at least two 128-column blocks so both v7x TensorCores
    # get work.
    n128 = _round_up(n, 128)
    steps = 1 if n128 < 256 else max(2, pl.cdiv(n128, tile_n))
    tile = _round_up(pl.cdiv(n128, steps), 128)

    # sub-chunk size: multiple of 128 that divides the tile (bounds VMEM intermediates)
    chunk = max(128, (min(chunk, tile) // 128) * 128)
    if tile % chunk:
        chunk = 256 if tile % 256 == 0 else 128
    n_chunks = tile // chunk

    n_pad = _round_up(n, tile)
    cidx_p = jnp.zeros((1, n_pad), jnp.int32).at[0, :n].set(cidx)   # padded idx=0, sliced off

    kernel = functools.partial(traj_break_kernel, chunk=chunk, n_chunks=n_chunks)

    out_t = pl.pallas_call(
        kernel,
        out_shape=jax.ShapeDtypeStruct((d, n_pad), jnp.bfloat16),
        grid_spec=pltpu.PrefetchScalarGridSpec(
            num_scalar_prefetch=0,
            grid=(n_pad // tile,),
            in_specs=[
                pl.BlockSpec((1, tile), lambda i: (0, i)),      # indices, lane-dense
                pl.BlockSpec((d, V_PAD), lambda i: (0, 0)),     # pairwise table, resident
            ],
            out_specs=pl.BlockSpec((d, tile), lambda i: (0, i)),
        ),
        compiler_params=pltpu.CompilerParams(
            dimension_semantics=("parallel",)),
    )(cidx_p, w2t)

    if transposed_output:
        # fusion-friendly layout for consumers that can take (D, N) bf16 directly
        return out_t[:, :n]
    # module contract: (N, D) float32 -- one fused slice + convert + transpose pass
    return out_t[:, :n].astype(jnp.float32).T


def make_params(embedding_dim, key):
    # nn.Embedding(9, D) with xavier_normal_ init, rows at the prefix indices
    # (start-of-range rows) zeroed out, exactly as in TrajBreakEmbedder.__init__.
    std = (2.0 / (VOCAB + embedding_dim)) ** 0.5
    weight = jax.random.normal(key, (VOCAB, embedding_dim), jnp.float32) * std
    prefix = jnp.array([0, FOLLOWER_ROT_LEN], dtype=jnp.int32)   # (2,)
    weight = weight.at[prefix, :].set(0.0)
    w2t = precompute_pairwise_table(weight)      # hoisted out of the forward path
    return weight, prefix, w2t


def reference(state_cn, prefix, weight):
    # pure f32 gather + sum (the PyTorch semantics)
    idx = state_cn.astype(jnp.int32) + prefix.reshape(-1, 1)     # (C, N)
    emb = jnp.take(weight, idx, axis=0)                          # (C, N, D)
    return jnp.sum(emb, axis=0)                                  # (N, D)


if __name__ == "__main__":
    key = jax.random.PRNGKey(0)
    k_w, k_s0, k_s1 = jax.random.split(key, 3)

    embedding_dim = 32
    seq_len = 8

    weight, prefix, w2t = make_params(embedding_dim, k_w)

    # state: (2, N). channel 0 indexes follower-rotation slots [0, 6),
    # channel 1 indexes trajectory-break slots (offset by prefix into [6, 9)).
    ch0 = jax.random.randint(k_s0, (seq_len,), 0, FOLLOWER_ROT_LEN, jnp.int32)
    ch1 = jax.random.randint(k_s1, (seq_len,), 0, VOCAB - FOLLOWER_ROT_LEN, jnp.int32)
    state = jnp.stack([ch0, ch1], axis=0)                        # (2, 8)

    fwd = jax.jit(traj_break_forward)
    out = jax.block_until_ready(fwd(state, prefix, w2t))
    assert out.shape == (seq_len, embedding_dim)
    assert out.dtype == jnp.float32

    # loose check vs the PyTorch-style f32 gather+sum (covers bf16 table rounding)
    ref = reference(state, prefix, weight)
    assert jnp.allclose(out, ref, atol=1e-2, rtol=1e-2)

    # tight check vs the bf16 pairwise table actually fed to the kernel
    # (one-hot selection + bf16 store are exact)
    idx = state.astype(jnp.int32) + prefix.reshape(-1, 1)
    cidx = idx[0] * VOCAB + idx[1]
    w2 = (weight[:, None, :] + weight[None, :, :]).reshape(VOCAB * VOCAB, embedding_dim)
    ref_bf16 = w2.astype(jnp.bfloat16).astype(jnp.float32)[cidx]
    assert jnp.allclose(out, ref_bf16, atol=1e-6, rtol=1e-6)

    print("KERNEL_OK")
</pallas_src>

<mosaic_0001>
module attributes {stable_mosaic.version = 11 : i64} {
  func.func @traj_break_kernel(%arg0: i32, %arg1: memref<1x128xi32, #tpu.memory_space<vmem>>, %arg2: memref<32x128xbf16, #tpu.memory_space<vmem>>, %arg3: memref<32x128xbf16, #tpu.memory_space<vmem>>) attributes {dimension_semantics = [#tpu.dimension_semantics<parallel>], iteration_bounds = array<i64: 1>, scalar_prefetch = 0 : i64, scratch_operands = 0 : i64, tpu.core_type = #tpu.core_type<tc>, window_params = [{transform_indices = @transform_0, window_bounds = array<i64: 1, 128>}, {pipeline_mode = #tpu.pipeline_mode<synchronous>, transform_indices = @transform_1, window_bounds = array<i64: 32, 128>}, {transform_indices = @transform_2, window_bounds = array<i64: 32, 128>}]} {
    %c0_i32 = arith.constant 0 : i32
    %c128_i32 = arith.constant 128 : i32
    %0 = arith.muli %c0_i32, %c128_i32 : i32
    %1 = tpu.assume_multiple %0, 128 : i32
    %c0 = arith.constant 0 : index
    %2 = arith.index_cast %1 : i32 to index
    %3 = vector.load %arg1[%c0, %2] : memref<1x128xi32, #tpu.memory_space<vmem>>, vector<1x128xi32>
    %4 = tpu.iota {dimensions = array<i32: 0>} : vector<128x128xi32>
    %5 = vector.broadcast %3 : vector<1x128xi32> to vector<128x128xi32>
    %6 = arith.cmpi eq, %4, %5 : vector<128x128xi32>
    %7 = arith.extui %6 : vector<128x128xi1> to vector<128x128xi32>
    %8 = arith.sitofp %7 : vector<128x128xi32> to vector<128x128xf32>
    %9 = arith.truncf %8 : vector<128x128xf32> to vector<128x128xbf16>
    %c0_0 = arith.constant 0 : index
    %c0_1 = arith.constant 0 : index
    %10 = vector.load %arg2[%c0_0, %c0_1] : memref<32x128xbf16, #tpu.memory_space<vmem>>, vector<32x128xbf16>
    %cst = arith.constant dense<0.000000e+00> : vector<32x128xf32>
    %11 = tpu.matmul %10, %9, %cst {dimension_numbers = #tpu.dot_dimension_numbers<[1], [0], [0], [1], [0, 0, 1, 1], [], []>} : vector<32x128xbf16>, vector<128x128xbf16>, vector<32x128xf32> -> vector<32x128xf32>
    %12 = arith.truncf %11 : vector<32x128xf32> to vector<32x128xbf16>
    %c0_2 = arith.constant 0 : index
    %13 = arith.index_cast %1 : i32 to index
    %14 = vector.load %arg3[%c0_2, %13] : memref<32x128xbf16, #tpu.memory_space<vmem>>, vector<32x128xbf16>
    tpu.vector_store %arg3[%c0_2, %13], %12 {strides = array<i32>} : memref<32x128xbf16, #tpu.memory_space<vmem>>, vector<32x128xbf16>,
    %c1_i32 = arith.constant 1 : i32
    return
  }
  func.func @transform_0(%arg0: i32) -> (i32, i32) {
    %c0_i32 = arith.constant 0 : i32
    %c0_i32_0 = arith.constant 0 : i32
    return %c0_i32, %arg0 : i32, i32
  }
  func.func @transform_1(%arg0: i32) -> (i32, i32) {
    %c0_i32 = arith.constant 0 : i32
    %c0_i32_0 = arith.constant 0 : i32
    %c0_i32_1 = arith.constant 0 : i32
    return %c0_i32, %c0_i32_0 : i32, i32
  }
  func.func @transform_2(%arg0: i32) -> (i32, i32) {
    %c0_i32 = arith.constant 0 : i32
    %c0_i32_0 = arith.constant 0 : i32
    return %c0_i32, %arg0 : i32, i32
  }
}

</mosaic_0001>

<llo_original>
// kernel: traj_break_forward.1
$region0: #{traj_break_forward.1}
  #allocation0 [shape = 'u32[]', space=smem, size = 0x4, offset = 0x4, fixed_abs, tag = 'smem constant byte address 0x4 - core index']
  #allocation1 [shape = 'u32[144,128]{1,0:T(1,128)}', space=vmem, size = 0x12000, scoped, tag = 'internal scratch']
  %s0 = inlined_call_operand.vmem [shape: s32[1,128], index: 0, kind: input, shape index: {}]
  %s1 = inlined_call_operand.vmem [shape: bf16[32,128], index: 1, kind: input, shape index: {}]
  %s2 = inlined_call_operand.vmem [shape: bf16[32,128], index: 2, kind: output, shape index: {}]
  %s3 = sld [smem:[#allocation0]]
  $region18: #{traj_break_forward.1} parent=0
    _
  %s5 = ssub.s32 1, %s3
  %s6 = scalar_select 0, %s5, %s3
  // Predicated region
  $region2: #{traj_break_forward.1} parent=0 // pred_check
    _
  $region3: #{traj_break_forward.1} parent=0 // pred_check_branch
    %8 = sbr.rel (0) target = $region5
  $region4: #{traj_break_forward.1} parent=0 // pred_region
    _
  $region5: #{traj_break_forward.1} parent=0 // pred_fallthru
    _
  // Predicated region
  $region6: #{traj_break_forward.1} parent=0 // pred_check
    _
  $region7: #{traj_break_forward.1} parent=0 // pred_check_branch
    %10 = sbr.rel (0) target = $region9
  $region8: #{traj_break_forward.1} parent=0 // pred_region
    _
  $region9: #{traj_break_forward.1} parent=0 // pred_fallthru
    _
  %v12 = vld [vmem:[%s0] sm:$0x1]
  %v13 = vlaneseq
  %v14 = vshrl.u32 %v13, 7
  %v15 = vadd.s32 %v14, 8
  %v16 = vadd.s32 %v14, 16
  %v17 = vadd.s32 %v14, 24
  %v18 = vadd.s32 %v14, 32
  %v19 = vadd.s32 %v14, 40
  %v20 = vadd.s32 %v14, 48
  %v21 = vadd.s32 %v14, 56
  %v22 = vadd.s32 %v14, 64
  %v23 = vadd.s32 %v14, 72
  %v24 = vadd.s32 %v14, 80
  %v25 = vadd.s32 %v14, 88
  %v26 = vadd.s32 %v14, 96
  %v27 = vadd.s32 %v14, 104
  %v28 = vadd.s32 %v14, 112
  %v29 = vadd.s32 %v14, 120
  %v30 = vlaneseq
  %v31 = vshrl.u32 %v30, 7
  %v32 = vsub.s32 0, %v31
  %v33 = vrot.slane %v12, %v32
  %vm34 = vcmp.eq.s32.totalorder %v14, %v33
  %vm35 = vcmp.eq.s32.totalorder %v15, %v33
  %vm36 = vcmp.eq.s32.totalorder %v16, %v33
  %vm37 = vcmp.eq.s32.totalorder %v17, %v33
  %vm38 = vcmp.eq.s32.totalorder %v18, %v33
  %vm39 = vcmp.eq.s32.totalorder %v19, %v33
  %vm40 = vcmp.eq.s32.totalorder %v20, %v33
  %vm41 = vcmp.eq.s32.totalorder %v21, %v33
  %vm42 = vcmp.eq.s32.totalorder %v22, %v33
  %vm43 = vcmp.eq.s32.totalorder %v23, %v33
  %vm44 = vcmp.eq.s32.totalorder %v24, %v33
  %vm45 = vcmp.eq.s32.totalorder %v25, %v33
  %vm46 = vcmp.eq.s32.totalorder %v26, %v33
  %vm47 = vcmp.eq.s32.totalorder %v27, %v33
  %vm48 = vcmp.eq.s32.totalorder %v28, %v33
  %vm49 = vcmp.eq.s32.totalorder %v29, %v33
  %v50 = vsel %vm34, 1, 0
  %v51 = vsel %vm35, 1, 0
  %v52 = vsel %vm36, 1, 0
  %v53 = vsel %vm37, 1, 0
  %v54 = vsel %vm38, 1, 0
  %v55 = vsel %vm39, 1, 0
  %v56 = vsel %vm40, 1, 0
  %v57 = vsel %vm41, 1, 0
  %v58 = vsel %vm42, 1, 0
  %v59 = vsel %vm43, 1, 0
  %v60 = vsel %vm44, 1, 0
  %v61 = vsel %vm45, 1, 0
  %v62 = vsel %vm46, 1, 0
  %v63 = vsel %vm47, 1, 0
  %v64 = vsel %vm48, 1, 0
  %v65 = vsel %vm49, 1, 0
  %v66 = vcvt.s32.f32 %v50
  %v67 = vcvt.s32.f32 %v51
  %v68 = vcvt.s32.f32 %v52
  %v69 = vcvt.s32.f32 %v53
  %v70 = vcvt.s32.f32 %v54
  %v71 = vcvt.s32.f32 %v55
  %v72 = vcvt.s32.f32 %v56
  %v73 = vcvt.s32.f32 %v57
  %v74 = vcvt.s32.f32 %v58
  %v75 = vcvt.s32.f32 %v59
  %v76 = vcvt.s32.f32 %v60
  %v77 = vcvt.s32.f32 %v61
  %v78 = vcvt.s32.f32 %v62
  %v79 = vcvt.s32.f32 %v63
  %v80 = vcvt.s32.f32 %v64
  %v81 = vcvt.s32.f32 %v65
  %v82 = vpack.c.bf16 %v67, %v66
  %v83 = vpack.c.bf16 %v69, %v68
  %v84 = vpack.c.bf16 %v71, %v70
  %v85 = vpack.c.bf16 %v73, %v72
  %v86 = vpack.c.bf16 %v75, %v74
  %v87 = vpack.c.bf16 %v77, %v76
  %v88 = vpack.c.bf16 %v79, %v78
  %v89 = vpack.c.bf16 %v81, %v80
  %v90 = vld [vmem:[%s1] sm:$0xf]
  %v91 = vld [vmem:[%s1 + $0x4] sm:$0xf]
  %v92 = vld [vmem:[%s1 + $0x8] sm:$0xf]
  %v93 = vld [vmem:[%s1 + $0xc] sm:$0xf]
  %v98 = vunpack.c.l.b16 %v90
  %v99 = vunpack.c.l.b16 %v91
  %v100 = vunpack.c.l.b16 %v92
  %v101 = vunpack.c.l.b16 %v93
  %v102 = vpack.c.b16 %v99, %v98
  %v103 = vpack.c.b16 %v101, %v100
  %106 = vmatprep.subr.bf16.mxu0 0
  %107 = vmatpush1.bf16.msra.mxu0 %v82
  %108 = vmatprep.subr.bf16.mxu0 0
  %109 = vmatpush1.bf16.msra.mxu0 %v83
  %110 = vmatprep.subr.bf16.mxu0 0
  %111 = vmatpush1.bf16.msra.mxu0 %v84
  %112 = vmatprep.subr.bf16.mxu0 0
  %113 = vmatpush1.bf16.msra.mxu0 %v85
  %114 = vmatprep.subr.bf16.mxu0 0
  %115 = vmatpush1.bf16.msra.mxu0 %v86
  %116 = vmatprep.subr.bf16.mxu0 0
  %117 = vmatpush1.bf16.msra.mxu0 %v87
  %118 = vmatprep.subr.bf16.mxu0 0
  %119 = vmatpush1.bf16.msra.mxu0 %v88
  %120 = vmatprep.subr.bf16.mxu0 0
  %121 = vmatpush1.bf16.msra.mxu0 %v89
  %122 = vmatprep.subr.bf16.mxu0 0
  %123 = vmatpush1.bf16.msra.mxu0 0
  %124 = vmatprep.subr.bf16.mxu0 0
  %125 = vmatpush1.bf16.msra.mxu0 0
  %126 = vmatprep.subr.bf16.mxu0 0
  %127 = vmatpush1.bf16.msra.mxu0 0
  %128 = vmatprep.subr.bf16.mxu0 0
  %129 = vmatpush1.bf16.msra.mxu0 0
  %130 = vmatprep.subr.bf16.mxu0 0
  %131 = vmatpush1.bf16.msra.mxu0 0
  %132 = vmatprep.subr.bf16.mxu0 0
  %133 = vmatpush1.bf16.msra.mxu0 0
  %134 = vmatprep.subr.bf16.mxu0 0
  %135 = vmatpush1.bf16.msra.mxu0 0
  %136 = vmatprep.subr.bf16.mxu0 0
  %137 = vmatpush1.bf16.msra.mxu0 0
  %138 = vmatprep.mubr.bf16.mxu0 0
  %139 = vmatmul.mubr.bf16.gmra.mrb[0].mxu0 %v102
  %v140 = vpop.f32.mrb[0].mxu0
  %v141 = vadd.f32 0.0, %v140
  %v142 = vpop.f32.mrb[0].mxu0
  %v143 = vpop.f32.mrb[0].mxu0
  %v144 = vadd.f32 0.0, %v143
  %v145 = vpop.f32.mrb[0].mxu0
  %146 = vmatprep.mubr.bf16.mxu0 0
  %147 = vmatmul.mubr.bf16.gmra.mrb[0].mxu0 %v103
  %v148 = vpop.f32.mrb[0].mxu0
  %v149 = vadd.f32 0.0, %v148
  %v150 = vpop.f32.mrb[0].mxu0
  %v151 = vpop.f32.mrb[0].mxu0
  %v152 = vadd.f32 0.0, %v151
  %v153 = vpop.f32.mrb[0].mxu0
  %154 = vdwg.mxu0
  %v155 = vpack.c.bf16 %v144, %v141
  %v156 = vpack.c.bf16 %v152, %v149
  %v159 = vunpack.c.l.b16 %v155
  %v160 = vunpack.c.h.b16 %v155
  %v161 = vunpack.c.l.b16 %v156
  %v162 = vunpack.c.h.b16 %v156
  %v163 = vpack.c.b16 %v159, %v159
  %v164 = vpack.c.b16 %v160, %v160
  %v165 = vpack.c.b16 %v161, %v161
  %v166 = vpack.c.b16 %v162, %v162
  %171 = vst [vmem:[%s2] sm:$0xf] %v163
  %172 = vst [vmem:[%s2 + $0x4] sm:$0xf] %v164
  %173 = vst [vmem:[%s2 + $0x8] sm:$0xf] %v165
  %174 = vst [vmem:[%s2 + $0xc] sm:$0xf] %v166
  // Predicated region
  $region10: #{traj_break_forward.1} parent=0 // pred_check
    _
  $region11: #{traj_break_forward.1} parent=0 // pred_check_branch
    %176 = sbr.rel (0) target = $region13
  $region12: #{traj_break_forward.1} parent=0 // pred_region
    _
  $region13: #{traj_break_forward.1} parent=0 // pred_fallthru
    _
  // Predicated region
  $region14: #{traj_break_forward.1} parent=0 // pred_check
    _
  $region15: #{traj_break_forward.1} parent=0 // pred_check_branch
    %178 = sbr.rel (0) target = $region17
  $region16: #{traj_break_forward.1} parent=0 // pred_region
    _
  $region17: #{traj_break_forward.1} parent=0 // pred_fallthru
    _

</llo_original>
